<compile_context>
chip_gen: v7x
topology: tpu7x:2x2x1
jax: 0.10.0
libtpu: 0.0.40
codegen_flags: <defaults>
</compile_context>

<pallas_src>
import jax
import jax.numpy as jnp
from jax.experimental import pallas as pl
from jax.experimental.pallas import tpu as pltpu

_VMEM_LIMIT = 32 * 1024 * 1024   # safe on v5e/v6e/v7x
_LANE = 128                      # lane width
_SUBLANE = 16                    # bf16 sublane packing


def _round_up(x, m):
    return ((x + m - 1) // m) * m


def _pad_axis(x, target, axis):
    pad = target - x.shape[axis]
    if pad == 0:
        return x
    widths = [(0, 0)] * x.ndim
    widths[axis] = (0, pad)
    return jnp.pad(x, widths)


# --------------------------------------------------------------------------------------
# Pallas kernel 1: DeepMLP_edge forward (fused two-layer MLP on the MXU, bf16 in / f32 acc)
#   Linear(F, H) -> ReLU -> Linear(H, H)
# --------------------------------------------------------------------------------------
def _mlp_kernel(x_ref, w1_ref, b1_ref, w2_ref, b2_ref, o_ref):
    x = x_ref[...]                                                    # (tile_n, Fp) bf16
    h = jnp.dot(x, w1_ref[...], preferred_element_type=jnp.float32)   # f32 accumulate
    h = jnp.maximum(h + b1_ref[...], 0.0).astype(jnp.bfloat16)        # ReLU, back to bf16
    o = jnp.dot(h, w2_ref[...], preferred_element_type=jnp.float32)
    o_ref[...] = o + b2_ref[...]                                      # (tile_n, Hp) f32


def deep_mlp_edge(features, w1, b1, w2, b2, *, tile_n=256):
    """DeepMLP_edge forward. Returns f32 reps padded to (N_pad, H_pad); caller slices."""
    N, F = features.shape
    H = w1.shape[1]
    Fp = _round_up(F, _LANE)
    Hp = _round_up(H, _LANE)
    tile_n = min(tile_n, _round_up(N, _SUBLANE))
    Np = _round_up(N, tile_n)

    x = _pad_axis(_pad_axis(features, Np, 0), Fp, 1).astype(jnp.bfloat16)
    w1p = _pad_axis(_pad_axis(w1, Fp, 0), Hp, 1).astype(jnp.bfloat16)
    w2p = _pad_axis(_pad_axis(w2, Hp, 0), Hp, 1).astype(jnp.bfloat16)
    b1p = _pad_axis(jnp.reshape(b1, (1, -1)).astype(jnp.float32), Hp, 1)
    b2p = _pad_axis(jnp.reshape(b2, (1, -1)).astype(jnp.float32), Hp, 1)

    return pl.pallas_call(
        _mlp_kernel,
        out_shape=jax.ShapeDtypeStruct((Np, Hp), jnp.float32),
        grid_spec=pltpu.PrefetchScalarGridSpec(
            num_scalar_prefetch=0,
            grid=(Np // tile_n,),
            in_specs=[
                pl.BlockSpec((tile_n, Fp), lambda i: (i, 0)),   # node-feature tile
                pl.BlockSpec((Fp, Hp), lambda i: (0, 0)),       # W1  (VMEM resident)
                pl.BlockSpec((1, Hp), lambda i: (0, 0)),        # b1
                pl.BlockSpec((Hp, Hp), lambda i: (0, 0)),       # W2  (VMEM resident)
                pl.BlockSpec((1, Hp), lambda i: (0, 0)),        # b2
            ],
            out_specs=pl.BlockSpec((tile_n, Hp), lambda i: (i, 0)),
        ),
        compiler_params=pltpu.CompilerParams(
            dimension_semantics=("parallel",),
            vmem_limit_bytes=_VMEM_LIMIT,
        ),
    )(x, w1p, b1p, w2p, b2p)


# --------------------------------------------------------------------------------------
# Pallas kernel 2: get_estimated_weigths, gather fused in-kernel.
#   weights[e] = relu( <rep[src_e], rep[dst_e]> )
# Representations arrive transposed (Hp, Np) in bf16 and stay VMEM-resident across the
# whole edge grid; the row gather is a one-hot (Np, tile_e) matmul on the MXU, the H
# reduction is a sublane reduce, and the result lands directly in a lane-dense (1, tile_e)
# output row.
# --------------------------------------------------------------------------------------
def _edge_weight_kernel(ids_ref, rept_ref, o_ref):
    # ids_ref:  (2, tile_e) int32   row 0 = src node ids, row 1 = dst node ids
    # rept_ref: (Hp, Np)   bf16     representations^T, VMEM resident
    # o_ref:    (1, tile_e) f32     lane-dense output row
    n_pad = rept_ref.shape[1]
    tile_e = ids_ref.shape[1]

    node_ids = jax.lax.broadcasted_iota(jnp.int32, (n_pad, tile_e), 0)
    oh_src = jnp.where(node_ids == ids_ref[0:1, :], 1.0, 0.0).astype(jnp.bfloat16)
    oh_dst = jnp.where(node_ids == ids_ref[1:2, :], 1.0, 0.0).astype(jnp.bfloat16)

    rept = rept_ref[...]                                                  # (Hp, Np) bf16
    x0t = jnp.dot(rept, oh_src, preferred_element_type=jnp.float32)       # (Hp, tile_e)
    x1t = jnp.dot(rept, oh_dst, preferred_element_type=jnp.float32)       # (Hp, tile_e)

    w = jnp.sum(x0t * x1t, axis=0, keepdims=True)                         # (1, tile_e)
    o_ref[...] = jnp.maximum(w, 0.0)


def estimated_edge_weights(total_edge_index, representations_t, *, tile_e=512):
    """Per-edge relu(dot(rep[src], rep[dst])) with the gather fused into the kernel."""
    Hp, Np = representations_t.shape
    E = total_edge_index.shape[1]
    tile_e = min(tile_e, _round_up(E, _LANE))
    Ep = _round_up(E, tile_e)
    num_tiles = Ep // tile_e
    ids = _pad_axis(total_edge_index.astype(jnp.int32), Ep, 1)   # pad with node 0; sliced off

    out = pl.pallas_call(
        _edge_weight_kernel,
        out_shape=jax.ShapeDtypeStruct((num_tiles, tile_e), jnp.float32),
        grid_spec=pltpu.PrefetchScalarGridSpec(
            num_scalar_prefetch=0,
            grid=(num_tiles,),
            in_specs=[
                pl.BlockSpec((2, tile_e), lambda i: (0, i)),   # edge-id tile (ids on lanes)
                pl.BlockSpec((Hp, Np), lambda i: (0, 0)),      # reps^T (VMEM resident)
            ],
            out_specs=pl.BlockSpec((1, tile_e), lambda i: (i, 0)),
        ),
        compiler_params=pltpu.CompilerParams(
            dimension_semantics=("parallel",),
            vmem_limit_bytes=_VMEM_LIMIT,
        ),
    )(ids, representations_t)
    return out.reshape(-1)[:E]


# --------------------------------------------------------------------------------------
# EstimateAdj.forward equivalent (epoch == 0 path, i.e. the `else` branch)
# --------------------------------------------------------------------------------------
def estimate_adj_forward(edge_index, pred_edge_index, features, mlp_params, epoch=0):
    w1, b1, w2, b2 = mlp_params
    N = features.shape[0]
    H = w2.shape[1]
    orig_edge_size = edge_index.shape[1]
    total_edge_index = jnp.concatenate([edge_index, pred_edge_index], axis=1)

    # representations = self.estimator(features)
    reps_pad = deep_mlp_edge(features, w1, b1, w2, b2)        # (N_pad, H_pad) f32
    representations = reps_pad[:N, :H]

    # get_estimated_weigths: gather + mul + reduce + relu fully fused in the edge kernel.
    # Padded H columns of reps are exactly zero, so feeding the padded (bf16, transposed)
    # representations leaves the per-edge dot products unchanged; padded N rows are never
    # selected because edge ids < N.
    reps_t = reps_pad.T.astype(jnp.bfloat16)                  # (H_pad, N_pad)
    predictor_weights = estimated_edge_weights(total_edge_index, reps_t)

    # TODO(synk): the `epoch % args.edge_change_epoch == 0 and epoch > 0` rewiring branch
    # (argsort / isin / to_undirected) produces data-dependent dynamic shapes and has no
    # clean Pallas equivalent; only the epoch==0 / else path is implemented here.
    predictor_weights = predictor_weights[:orig_edge_size]

    return representations, predictor_weights, total_edge_index, edge_index


# --------------------------------------------------------------------------------------
# Demo / self-test
# --------------------------------------------------------------------------------------
if __name__ == "__main__":
    key = jax.random.PRNGKey(0)
    k_feat, k_w1, k_b1, k_w2, k_b2, k_e0, k_e1 = jax.random.split(key, 7)

    N = 512          # number of nodes
    F = 20           # nfea
    H = 32           # args.edge_hidden
    E0 = 1500        # original edges
    E1 = 500         # candidate (predicted) edges

    features = jax.random.normal(k_feat, (N, F), dtype=jnp.float32)

    # Deterministic parameter init for DeepMLP_edge (synthetic, no checkpoint load).
    w1 = 0.1 * jax.random.normal(k_w1, (F, H), dtype=jnp.float32)
    b1 = 0.05 * jax.random.normal(k_b1, (H,), dtype=jnp.float32)
    w2 = 0.1 * jax.random.normal(k_w2, (H, H), dtype=jnp.float32)
    b2 = 0.05 * jax.random.normal(k_b2, (H,), dtype=jnp.float32)
    mlp_params = (w1, b1, w2, b2)

    edge_index = jax.random.randint(k_e0, (2, E0), 0, N, dtype=jnp.int32)
    pred_edge_index = jax.random.randint(k_e1, (2, E1), 0, N, dtype=jnp.int32)

    reps, pred_w, total_ei, ei = estimate_adj_forward(
        edge_index, pred_edge_index, features, mlp_params, epoch=0
    )
    jax.block_until_ready((reps, pred_w, total_ei, ei))

    # Pure-JAX f32 reference.  Kernels run bf16 matmuls with f32 accumulation, so the
    # comparison tolerance is loosened accordingly (per the perf review).
    h_ref = jnp.maximum(features @ w1 + b1, 0.0)
    reps_ref = h_ref @ w2 + b2
    te = jnp.concatenate([edge_index, pred_edge_index], axis=1)
    w_ref = jnp.maximum(jnp.sum(reps_ref[te[0]] * reps_ref[te[1]], axis=1), 0.0)[:E0]

    assert reps.shape == (N, H)
    assert pred_w.shape == (E0,)
    assert total_ei.shape == (2, E0 + E1)
    assert jnp.allclose(reps, reps_ref, atol=3e-2, rtol=3e-2)
    assert jnp.allclose(pred_w, w_ref, atol=3e-2, rtol=3e-2)

    print("KERNEL_OK")
</pallas_src>

<mosaic_0001>
module attributes {stable_mosaic.version = 11 : i64} {
  func.func @_mlp_kernel(%arg0: i32, %arg1: memref<256x128xbf16, #tpu.memory_space<vmem>>, %arg2: memref<128x128xbf16, #tpu.memory_space<vmem>>, %arg3: memref<1x128xf32, #tpu.memory_space<vmem>>, %arg4: memref<128x128xbf16, #tpu.memory_space<vmem>>, %arg5: memref<1x128xf32, #tpu.memory_space<vmem>>, %arg6: memref<256x128xf32, #tpu.memory_space<vmem>>) attributes {dimension_semantics = [#tpu.dimension_semantics<parallel>], iteration_bounds = array<i64: 2>, scalar_prefetch = 0 : i64, scratch_operands = 0 : i64, tpu.core_type = #tpu.core_type<tc>, window_params = [{transform_indices = @transform_0, window_bounds = array<i64: 256, 128>}, {pipeline_mode = #tpu.pipeline_mode<synchronous>, transform_indices = @transform_1, window_bounds = array<i64: 128, 128>}, {pipeline_mode = #tpu.pipeline_mode<synchronous>, transform_indices = @transform_2, window_bounds = array<i64: 1, 128>}, {pipeline_mode = #tpu.pipeline_mode<synchronous>, transform_indices = @transform_3, window_bounds = array<i64: 128, 128>}, {pipeline_mode = #tpu.pipeline_mode<synchronous>, transform_indices = @transform_4, window_bounds = array<i64: 1, 128>}, {transform_indices = @transform_5, window_bounds = array<i64: 256, 128>}]} {
    %c0 = arith.constant 0 : index
    %c0_0 = arith.constant 0 : index
    %0 = vector.load %arg1[%c0, %c0_0] : memref<256x128xbf16, #tpu.memory_space<vmem>>, vector<256x128xbf16>
    %c0_1 = arith.constant 0 : index
    %c0_2 = arith.constant 0 : index
    %1 = vector.load %arg2[%c0_1, %c0_2] : memref<128x128xbf16, #tpu.memory_space<vmem>>, vector<128x128xbf16>
    %cst = arith.constant dense<0.000000e+00> : vector<256x128xf32>
    %2 = tpu.matmul %0, %1, %cst {dimension_numbers = #tpu.dot_dimension_numbers<[1], [0], [0], [1], [0, 0, 1, 1], [], []>} : vector<256x128xbf16>, vector<128x128xbf16>, vector<256x128xf32> -> vector<256x128xf32>
    %c0_3 = arith.constant 0 : index
    %c0_4 = arith.constant 0 : index
    %3 = vector.load %arg3[%c0_3, %c0_4] : memref<1x128xf32, #tpu.memory_space<vmem>>, vector<1x128xf32>
    %4 = vector.broadcast %3 : vector<1x128xf32> to vector<256x128xf32>
    %5 = arith.addf %2, %4 : vector<256x128xf32>
    %cst_5 = arith.constant 0.000000e+00 : f32
    %6 = vector.broadcast %cst_5 : f32 to vector<256x128xf32>
    %7 = arith.maximumf %5, %6 : vector<256x128xf32>
    %8 = arith.truncf %7 : vector<256x128xf32> to vector<256x128xbf16>
    %c0_6 = arith.constant 0 : index
    %c0_7 = arith.constant 0 : index
    %9 = vector.load %arg4[%c0_6, %c0_7] : memref<128x128xbf16, #tpu.memory_space<vmem>>, vector<128x128xbf16>
    %cst_8 = arith.constant dense<0.000000e+00> : vector<256x128xf32>
    %10 = tpu.matmul %8, %9, %cst_8 {dimension_numbers = #tpu.dot_dimension_numbers<[1], [0], [0], [1], [0, 0, 1, 1], [], []>} : vector<256x128xbf16>, vector<128x128xbf16>, vector<256x128xf32> -> vector<256x128xf32>
    %c0_9 = arith.constant 0 : index
    %c0_10 = arith.constant 0 : index
    %11 = vector.load %arg5[%c0_9, %c0_10] : memref<1x128xf32, #tpu.memory_space<vmem>>, vector<1x128xf32>
    %12 = vector.broadcast %11 : vector<1x128xf32> to vector<256x128xf32>
    %13 = arith.addf %10, %12 : vector<256x128xf32>
    %c0_11 = arith.constant 0 : index
    %c0_12 = arith.constant 0 : index
    %14 = vector.load %arg6[%c0_11, %c0_12] : memref<256x128xf32, #tpu.memory_space<vmem>>, vector<256x128xf32>
    tpu.vector_store %arg6[%c0_11, %c0_12], %13 {strides = array<i32>} : memref<256x128xf32, #tpu.memory_space<vmem>>, vector<256x128xf32>,
    return
  }
  func.func @transform_0(%arg0: i32) -> (i32, i32) {
    %c0_i32 = arith.constant 0 : i32
    %c0_i32_0 = arith.constant 0 : i32
    return %arg0, %c0_i32 : i32, i32
  }
  func.func @transform_1(%arg0: i32) -> (i32, i32) {
    %c0_i32 = arith.constant 0 : i32
    %c0_i32_0 = arith.constant 0 : i32
    %c0_i32_1 = arith.constant 0 : i32
    return %c0_i32, %c0_i32_0 : i32, i32
  }
  func.func @transform_2(%arg0: i32) -> (i32, i32) {
    %c0_i32 = arith.constant 0 : i32
    %c0_i32_0 = arith.constant 0 : i32
    %c0_i32_1 = arith.constant 0 : i32
    return %c0_i32, %c0_i32_0 : i32, i32
  }
  func.func @transform_3(%arg0: i32) -> (i32, i32) {
    %c0_i32 = arith.constant 0 : i32
    %c0_i32_0 = arith.constant 0 : i32
    %c0_i32_1 = arith.constant 0 : i32
    return %c0_i32, %c0_i32_0 : i32, i32
  }
  func.func @transform_4(%arg0: i32) -> (i32, i32) {
    %c0_i32 = arith.constant 0 : i32
    %c0_i32_0 = arith.constant 0 : i32
    %c0_i32_1 = arith.constant 0 : i32
    return %c0_i32, %c0_i32_0 : i32, i32
  }
  func.func @transform_5(%arg0: i32) -> (i32, i32) {
    %c0_i32 = arith.constant 0 : i32
    %c0_i32_0 = arith.constant 0 : i32
    return %arg0, %c0_i32 : i32, i32
  }
}

</mosaic_0001>

<llo_original>
// kernel: tpu_custom_call.1
$region0: #{tpu_custom_call.1}
  #allocation0 [shape = 'u32[]', space=smem, size = 0x4, offset = 0x4, fixed_abs, tag = 'smem constant byte address 0x4 - core index']
  #allocation1 [shape = 'u32[144,128]{1,0:T(1,128)}', space=vmem, size = 0x12000, scoped, tag = 'internal scratch']
  %s0 = inlined_call_operand.hbm [shape: bf16[512,128], index: 0, kind: input, shape index: {}]
  %s1 = inlined_call_operand.hbm [shape: bf16[128,128], index: 1, kind: input, shape index: {}]
  %s2 = inlined_call_operand.vmem [shape: f32[1,128], index: 2, kind: input, shape index: {}]
  %s3 = inlined_call_operand.hbm [shape: bf16[128,128], index: 3, kind: input, shape index: {}]
  %s4 = inlined_call_operand.vmem [shape: f32[1,128], index: 4, kind: input, shape index: {}]
  %s5 = inlined_call_operand.hbm [shape: f32[512,128], index: 5, kind: output, shape index: {}]
  %s6 = sld [smem:[#allocation0]]
  $region65: #{tpu_custom_call.1} parent=0
    _
  %s8 = ssub.s32 1, %s6
  %s9 = scalar_select 0, %s8, %s6
  $region1: #{tpu_custom_call.1} parent=0
    #allocation2 [shape = 'u8[131072]{0}', space=vmem, size = 0x20000, scoped, tag = 'input window, operand 0']
    #allocation3 [shape = 's32[2]{0}', space=sflag, size = 0x8, scoped, tag = 'scoped memory for tpu_custom_call.1']
    #allocation4 [shape = 's32[2]{0}', space=sflag, size = 0x8, scoped, tag = 'scoped memory for tpu_custom_call.1']
    #allocation5 [shape = 'u8[32768]{0}', space=vmem, size = 0x8000, scoped, tag = 'input window, operand 1, single buffered']
    #allocation6 [shape = 's32[1]{0}', space=sflag, size = 0x4, scoped, tag = 'scoped memory for tpu_custom_call.1']
    #allocation7 [shape = 'u8[32768]{0}', space=vmem, size = 0x8000, scoped, tag = 'input window, operand 3, single buffered']
    #allocation8 [shape = 'u8[262144]{0}', space=vmem, size = 0x40000, scoped, tag = 'output window, operand 0']
    %10 = vsyncpa [#allocation3], 0
    %s11 = scalar_lea.sflag [#allocation3], 1
    %12 = vsyncpa %s11, 0
    %13 = vsyncpa [#allocation6], 0
    %14 = vsyncpa [#allocation4], 0
    %s15 = scalar_lea.sflag [#allocation4], 1
    %16 = vsyncpa %s15, 0
    loop: start=0, step=1, limit=4
    $region2: #{tpu_custom_call.1} parent=1 // loop_pre_header
      _
    $region3: #{tpu_custom_call.1} parent=1 // loop_header
      %s18 = sphi 0, %s22
      %p19 = scmp.ge.s32.totalorder %s18, 4
      %s28 = sphi 0, %s30
      %s31 = sphi 0, %s28
      %s32 = sphi 0, %s31
      %s48 = sphi 0, %s32
      %s52 = sphi 0, %s52
      %s54 = sphi 0, %s52
      %s55 = sphi 0, %s54
      %s69 = sphi 0, %s55
      %s73 = sphi 0, %s73
      %s75 = sphi 0, %s73
      %s76 = sphi 0, %s75
      %s90 = sphi 0, %s76
      %s94 = sphi 0, %s94
      %s96 = sphi 0, %s94
      %s97 = sphi 0, %s96
      %s111 = sphi 0, %s97
      %s115 = sphi 0, %s115
      %s117 = sphi 0, %s115
      %s118 = sphi 0, %s117
      %s132 = sphi 0, %s118
      %s138 = sphi 0, %s140
      %s141 = sphi 0, %s138
      %s142 = sphi 0, %s141
      %s158 = sphi 0, %s142
    $region4: #{tpu_custom_call.1} parent=1 // loop_header_branch
      %21 = sbr.rel (%p19) target = $region8
    $region5: #{tpu_custom_call.1} parent=1 // loop_body
      %s23 = ssub.s32 %s18, 1
      %s24 = ssub.s32 %s18, 2
      %s25 = sadd.s32 %s18, 1
      %s26 = ssub.s32 %s18, %s25
      %p27 = scmp.eq.s32.totalorder %s26, 0
      %s29 = sadd.s32 %s28, 1
      %s30 = scalar_select %p27, %s28, %s29
      %p33 = pneg %p27
      %p34 = scmp.eq.s32.totalorder %s18, 1
      %p35 = por %p33, %p34
      %p36 = scmp.ne.s32.totalorder %s28, %s31
      %p37 = scmp.eq.s32.totalorder %s18, 0
      %p38 = por %p36, %p37
      %p39 = scmp.ne.s32.totalorder %s28, %s31
      %p40 = scmp.eq.s32.totalorder %s23, 1
      %p41 = por %p39, %p40
      %p42 = scmp.ne.s32.totalorder %s31, %s32
      %p43 = scmp.eq.s32.totalorder %s23, 0
      %p44 = por %p42, %p43
      %p45 = scmp.ne.s32.totalorder %s31, %s32
      %p46 = scmp.eq.s32.totalorder %s24, 1
      %p47 = por %p45, %p46
      %p49 = scmp.ne.s32.totalorder %s32, %s48
      %p50 = scmp.eq.s32.totalorder %s24, 0
      %p51 = por %p49, %p50
      %s53 = sadd.s32 %s52, 1
      %p56 = scmp.eq.s32.totalorder %s18, 1
      %p57 = scmp.ne.s32.totalorder %s52, %s54
      %p58 = scmp.eq.s32.totalorder %s18, 0
      %p59 = por %p57, %p58
      %p60 = scmp.ne.s32.totalorder %s52, %s54
      %p61 = scmp.eq.s32.totalorder %s23, 1
      %p62 = por %p60, %p61
      %p63 = scmp.ne.s32.totalorder %s54, %s55
      %p64 = scmp.eq.s32.totalorder %s23, 0
      %p65 = por %p63, %p64
      %p66 = scmp.ne.s32.totalorder %s54, %s55
      %p67 = scmp.eq.s32.totalorder %s24, 1
      %p68 = por %p66, %p67
      %p70 = scmp.ne.s32.totalorder %s55, %s69
      %p71 = scmp.eq.s32.totalorder %s24, 0
      %p72 = por %p70, %p71
      %s74 = sadd.s32 %s73, 1
      %p77 = scmp.eq.s32.totalorder %s18, 1
      %p78 = scmp.ne.s32.totalorder %s73, %s75
      %p79 = scmp.eq.s32.totalorder %s18, 0
      %p80 = por %p78, %p79
      %p81 = scmp.ne.s32.totalorder %s73, %s75
      %p82 = scmp.eq.s32.totalorder %s23, 1
      %p83 = por %p81, %p82
      %p84 = scmp.ne.s32.totalorder %s75, %s76
      %p85 = scmp.eq.s32.totalorder %s23, 0
      %p86 = por %p84, %p85
      %p87 = scmp.ne.s32.totalorder %s75, %s76
      %p88 = scmp.eq.s32.totalorder %s24, 1
      %p89 = por %p87, %p88
      %p91 = scmp.ne.s32.totalorder %s76, %s90
      %p92 = scmp.eq.s32.totalorder %s24, 0
      %p93 = por %p91, %p92
      %s95 = sadd.s32 %s94, 1
      %p98 = scmp.eq.s32.totalorder %s18, 1
      %p99 = scmp.ne.s32.totalorder %s94, %s96
      %p100 = scmp.eq.s32.totalorder %s18, 0
      %p101 = por %p99, %p100
      %p102 = scmp.ne.s32.totalorder %s94, %s96
      %p103 = scmp.eq.s32.totalorder %s23, 1
      %p104 = por %p102, %p103
      %p105 = scmp.ne.s32.totalorder %s96, %s97
      %p106 = scmp.eq.s32.totalorder %s23, 0
      %p107 = por %p105, %p106
      %p108 = scmp.ne.s32.totalorder %s96, %s97
      %p109 = scmp.eq.s32.totalorder %s24, 1
      %p110 = por %p108, %p109
      %p112 = scmp.ne.s32.totalorder %s97, %s111
      %p113 = scmp.eq.s32.totalorder %s24, 0
      %p114 = por %p112, %p113
      %s116 = sadd.s32 %s115, 1
      %p119 = scmp.eq.s32.totalorder %s18, 1
      %p120 = scmp.ne.s32.totalorder %s115, %s117
      %p121 = scmp.eq.s32.totalorder %s18, 0
      %p122 = por %p120, %p121
      %p123 = scmp.ne.s32.totalorder %s115, %s117
      %p124 = scmp.eq.s32.totalorder %s23, 1
      %p125 = por %p123, %p124
      %p126 = scmp.ne.s32.totalorder %s117, %s118
      %p127 = scmp.eq.s32.totalorder %s23, 0
      %p128 = por %p126, %p127
      %p129 = scmp.ne.s32.totalorder %s117, %s118
      %p130 = scmp.eq.s32.totalorder %s24, 1
      %p131 = por %p129, %p130
      %p133 = scmp.ne.s32.totalorder %s118, %s132
      %p134 = scmp.eq.s32.totalorder %s24, 0
      %p135 = por %p133, %p134
      %s136 = ssub.s32 %s18, %s25
      %p137 = scmp.eq.s32.totalorder %s136, 0
      %s139 = sadd.s32 %s138, 1
      %s140 = scalar_select %p137, %s138, %s139
      %p143 = pneg %p137
      %p144 = scmp.eq.s32.totalorder %s18, 1
      %p145 = por %p143, %p144
      %p146 = scmp.ne.s32.totalorder %s138, %s141
      %p147 = scmp.eq.s32.totalorder %s18, 0
      %p148 = por %p146, %p147
      %p149 = scmp.ne.s32.totalorder %s138, %s141
      %p150 = scmp.eq.s32.totalorder %s23, 1
      %p151 = por %p149, %p150
      %p152 = scmp.ne.s32.totalorder %s141, %s142
      %p153 = scmp.eq.s32.totalorder %s23, 0
      %p154 = por %p152, %p153
      %p155 = scmp.ne.s32.totalorder %s141, %s142
      %p156 = scmp.eq.s32.totalorder %s24, 1
      %p157 = por %p155, %p156
      %p159 = scmp.ne.s32.totalorder %s142, %s158
      %p160 = scmp.eq.s32.totalorder %s24, 0
      %p161 = por %p159, %p160
      %p162 = scmp.le.s32.totalorder 1, %s18
      %p163 = scmp.lt.s32.totalorder %s18, 3
      %p164 = pnand %p162, %p163
      %p165 = pneg %p164
      // Predicated region
      $region9: #{tpu_custom_call.1} parent=5 // pred_check
        _
      $region10: #{tpu_custom_call.1} parent=5 // pred_check_branch
        %167 = sbr.rel (%p164) target = $region12
      $region11: #{tpu_custom_call.1} parent=5 // pred_region
        %s168 = ssub.s32 %s18, 1
        // Predicated region
        $region13: #{tpu_custom_call.1} parent=11 // pred_check
          %p169 = pneg %p65
        $region14: #{tpu_custom_call.1} parent=11 // pred_check_branch
          %171 = sbr.rel (%p169) target = $region16
        $region15: #{tpu_custom_call.1} parent=11 // pred_region
          %s173 = ssub.s32 1024, 1024
          %174 = vsyncadd [#allocation6], %s173
          %s175 = sshll.u32 [#allocation5], 4
          %s176 = int_to_ptr.vmem [resolvable:$true] %s175
          %181 = dma.hbm_to_vmem [thread:$0]  %s1, 1024, %s176, [#allocation6], 64, 64, 4
        $region16: #{tpu_custom_call.1} parent=11 // pred_fallthru
          _
        // Predicated region
        $region17: #{tpu_custom_call.1} parent=11 // pred_check
          %p182 = pneg %p86
        $region18: #{tpu_custom_call.1} parent=11 // pred_check_branch
          %184 = sbr.rel (%p182) target = $region20
        $region19: #{tpu_custom_call.1} parent=11 // pred_region
          _
        $region20: #{tpu_custom_call.1} parent=11 // pred_fallthru
          _
        // Predicated region
        $region21: #{tpu_custom_call.1} parent=11 // pred_check
          %p185 = pneg %p107
        $region22: #{tpu_custom_call.1} parent=11 // pred_check_branch
          %187 = sbr.rel (%p185) target = $region24
        $region23: #{tpu_custom_call.1} parent=11 // pred_region
          %s189 = ssub.s32 1024, 1024
          %190 = vsyncadd [#allocation6], %s189
          %s191 = sshll.u32 [#allocation7], 4
          %s192 = int_to_ptr.vmem [resolvable:$true] %s191
          %197 = dma.hbm_to_vmem [thread:$0]  %s3, 1024, %s192, [#allocation6], 64, 64, 4
        $region24: #{tpu_custom_call.1} parent=11 // pred_fallthru
          _
        // Predicated region
        $region25: #{tpu_custom_call.1} parent=11 // pred_check
          %p198 = pneg %p128
        $region26: #{tpu_custom_call.1} parent=11 // pred_check_branch
          %200 = sbr.rel (%p198) target = $region28
        $region27: #{tpu_custom_call.1} parent=11 // pred_region
          _
        $region28: #{tpu_custom_call.1} parent=11 // pred_fallthru
          _
      $region12: #{tpu_custom_call.1} parent=5 // pred_fallthru
        _
      %p201 = scmp.lt.s32.totalorder %s18, 2
      // Predicated region
      $region29: #{tpu_custom_call.1} parent=5 // pred_check
        %p202 = pneg %p201
      $region30: #{tpu_custom_call.1} parent=5 // pred_check_branch
        %204 = sbr.rel (%p202) target = $region32
      $region31: #{tpu_custom_call.1} parent=5 // pred_region
        // Predicated region
        $region33: #{tpu_custom_call.1} parent=31 // pred_check
          %p205 = pneg %p38
        $region34: #{tpu_custom_call.1} parent=31 // pred_check_branch
          %207 = sbr.rel (%p205) target = $region36
        $region35: #{tpu_custom_call.1} parent=31 // pred_region
          %s208 = sand.u32 %s28, 1
          %s209 = scalar_lea.sflag [#allocation3], %s208
          %s210 = sand.u32 %s28, 1
          %s211 = smul.addr %s210, 128
          %s212 = scalar_lea.vmem [#allocation2], %s211
          %s213 = smul.u32 32, %s18
          %s215 = ssub.s32 2048, 2048
          %216 = vsyncadd %s209, %s215
          %s217 = smul.addr %s213, 64
          %s218 = scalar_lea.hbm %s0, %s217
          %s219 = sshll.u32 %s212, 4
          %s220 = int_to_ptr.vmem [resolvable:$true] %s219
          %225 = dma.hbm_to_vmem [thread:$0]  %s218, 2048, %s220, %s209, 64, 64, 4
        $region36: #{tpu_custom_call.1} parent=31 // pred_fallthru
          _
      $region32: #{tpu_custom_call.1} parent=5 // pred_fallthru
        _
      %p226 = scmp.le.s32.totalorder 1, %s18
      %p227 = scmp.lt.s32.totalorder %s18, 3
      %p228 = pnand %p226, %p227
      %p229 = pneg %p228
      // Predicated region
      $region37: #{tpu_custom_call.1} parent=5 // pred_check
        _
      $region38: #{tpu_custom_call.1} parent=5 // pred_check_branch
        %231 = sbr.rel (%p228) target = $region40
      $region39: #{tpu_custom_call.1} parent=5 // pred_region
        %s232 = ssub.s32 %s18, 1
        %s233 = sand.u32 %s31, 1
        %s234 = scalar_lea.sflag [#allocation3], %s233
        %s235 = sand.u32 %s31, 1
        %s236 = smul.addr %s235, 128
        %s237 = scalar_lea.vmem [#allocation2], %s236
        // Predicated region
        $region41: #{tpu_custom_call.1} parent=39 // pred_check
          %p238 = pneg %p44
        $region42: #{tpu_custom_call.1} parent=39 // pred_check_branch
          %240 = sbr.rel (%p238) target = $region44
        $region43: #{tpu_custom_call.1} parent=39 // pred_region
          %241 = dma.done %s234, 2048
        $region44: #{tpu_custom_call.1} parent=39 // pred_fallthru
          _
        // Predicated region
        $region45: #{tpu_custom_call.1} parent=39 // pred_check
          %p242 = pneg %p65
        $region46: #{tpu_custom_call.1} parent=39 // pred_check_branch
          %244 = sbr.rel (%p242) target = $region48
        $region47: #{tpu_custom_call.1} parent=39 // pred_region
          %245 = dma.done [#allocation6], 1024
        $region48: #{tpu_custom_call.1} parent=39 // pred_fallthru
          _
        // Predicated region
        $region49: #{tpu_custom_call.1} parent=39 // pred_check
          %p246 = pneg %p107
        $region50: #{tpu_custom_call.1} parent=39 // pred_check_branch
          %248 = sbr.rel (%p246) target = $region52
        $region51: #{tpu_custom_call.1} parent=39 // pred_region
          %249 = dma.done [#allocation6], 1024
        $region52: #{tpu_custom_call.1} parent=39 // pred_fallthru
          _
        %s250 = sand.u32 %s31, 1
        %s251 = scalar_lea.sflag [#allocation3], %s250
        %s252 = sand.u32 %s31, 1
        %s253 = smul.addr %s252, 128
        %s254 = scalar_lea.vmem [#allocation2], %s253
        %p255 = pneg %p44
        %p256 = pneg %p41
        %p257 = pneg %p65
        %p258 = pneg %p62
        %p259 = pneg %p86
        %p260 = pneg %p83
        %p261 = pneg %p107
        %p262 = pneg %p104
        %p263 = pneg %p128
        %p264 = pneg %p125
        %p265 = pneg %p154
        %p266 = pneg %p151
        %s267 = sand.u32 %s141, 1
        %s268 = scalar_lea.sflag [#allocation4], %s267
        %s269 = sand.u32 %s141, 1
        %s270 = smul.addr %s269, 256
        %s271 = scalar_lea.vmem [#allocation8], %s270
        %s272 = smul.u32 32, %s23
        %s273 = smul.u32 32, %s23
        %v275 = vld [vmem:[%s237] sm:$0xf]
        %v276 = vld [vmem:[%s237 + $0x4] sm:$0xf]
        %v277 = vld [vmem:[%s237 + $0x8] sm:$0xf]
        %v278 = vld [vmem:[%s237 + $0xc] sm:$0xf]
        %v279 = vld [vmem:[%s237 + $0x10] sm:$0xf]
        %v280 = vld [vmem:[%s237 + $0x14] sm:$0xf]
        %v281 = vld [vmem:[%s237 + $0x18] sm:$0xf]
        %v282 = vld [vmem:[%s237 + $0x1c] sm:$0xf]
        %v283 = vld [vmem:[%s237 + $0x20] sm:$0xf]
        %v284 = vld [vmem:[%s237 + $0x24] sm:$0xf]
        %v285 = vld [vmem:[%s237 + $0x28] sm:$0xf]
        %v286 = vld [vmem:[%s237 + $0x2c] sm:$0xf]
        %v287 = vld [vmem:[%s237 + $0x30] sm:$0xf]
        %v288 = vld [vmem:[%s237 + $0x34] sm:$0xf]
        %v289 = vld [vmem:[%s237 + $0x38] sm:$0xf]
        %v290 = vld [vmem:[%s237 + $0x3c] sm:$0xf]
        %v291 = vld [vmem:[%s237 + $0x40] sm:$0xf]
        %v292 = vld [vmem:[%s237 + $0x44] sm:$0xf]
        %v293 = vld [vmem:[%s237 + $0x48] sm:$0xf]
        %v294 = vld [vmem:[%s237 + $0x4c] sm:$0xf]
        %v295 = vld [vmem:[%s237 + $0x50] sm:$0xf]
        %v296 = vld [vmem:[%s237 + $0x54] sm:$0xf]
        %v297 = vld [vmem:[%s237 + $0x58] sm:$0xf]
        %v298 = vld [vmem:[%s237 + $0x5c] sm:$0xf]
        %v299 = vld [vmem:[%s237 + $0x60] sm:$0xf]
        %v300 = vld [vmem:[%s237 + $0x64] sm:$0xf]
        %v301 = vld [vmem:[%s237 + $0x68] sm:$0xf]
        %v302 = vld [vmem:[%s237 + $0x6c] sm:$0xf]
        %v303 = vld [vmem:[%s237 + $0x70] sm:$0xf]
        %v304 = vld [vmem:[%s237 + $0x74] sm:$0xf]
        %v305 = vld [vmem:[%s237 + $0x78] sm:$0xf]
        %v306 = vld [vmem:[%s237 + $0x7c] sm:$0xf]
        %v307 = vld [vmem:[#allocation5] sm:$0xf]
        %v308 = vld [vmem:[#allocation5 + $0x4] sm:$0xf]
        %v309 = vld [vmem:[#allocation5 + $0x8] sm:$0xf]
        %v310 = vld [vmem:[#allocation5 + $0xc] sm:$0xf]
        %v311 = vld [vmem:[#allocation5 + $0x10] sm:$0xf]
        %v312 = vld [vmem:[#allocation5 + $0x14] sm:$0xf]
        %v313 = vld [vmem:[#allocation5 + $0x18] sm:$0xf]
        %v314 = vld [vmem:[#allocation5 + $0x1c] sm:$0xf]
        %v315 = vld [vmem:[#allocation5 + $0x20] sm:$0xf]
        %v316 = vld [vmem:[#allocation5 + $0x24] sm:$0xf]
        %v317 = vld [vmem:[#allocation5 + $0x28] sm:$0xf]
        %v318 = vld [vmem:[#allocation5 + $0x2c] sm:$0xf]
        %v319 = vld [vmem:[#allocation5 + $0x30] sm:$0xf]
        %v320 = vld [vmem:[#allocation5 + $0x34] sm:$0xf]
        %v321 = vld [vmem:[#allocation5 + $0x38] sm:$0xf]
        %v322 = vld [vmem:[#allocation5 + $0x3c] sm:$0xf]
        %v323 = vld [vmem:[%s2] sm:$0x1]
        %v325 = vlaneseq
        %v326 = vshrl.u32 %v325, 7
        %v327 = vsub.s32 0, %v326
        %v328 = vrot.slane %v323, %v327
        %v362 = vunpack.c.l.b16 %v275
        %v363 = vunpack.c.l.b16 %v276
        %v364 = vunpack.c.l.b16 %v277
        %v365 = vunpack.c.l.b16 %v278
        %v366 = vunpack.c.l.b16 %v279
        %v367 = vunpack.c.l.b16 %v280
        %v368 = vunpack.c.l.b16 %v281
        %v369 = vunpack.c.l.b16 %v282
        %v370 = vunpack.c.l.b16 %v283
        %v371 = vunpack.c.l.b16 %v284
        %v372 = vunpack.c.l.b16 %v285
        %v373 = vunpack.c.l.b16 %v286
        %v374 = vunpack.c.l.b16 %v287
        %v375 = vunpack.c.l.b16 %v288
        %v376 = vunpack.c.l.b16 %v289
        %v377 = vunpack.c.l.b16 %v290
        %v378 = vunpack.c.l.b16 %v291
        %v379 = vunpack.c.l.b16 %v292
        %v380 = vunpack.c.l.b16 %v293
        %v381 = vunpack.c.l.b16 %v294
        %v382 = vunpack.c.l.b16 %v295
        %v383 = vunpack.c.l.b16 %v296
        %v384 = vunpack.c.l.b16 %v297
        %v385 = vunpack.c.l.b16 %v298
        %v386 = vunpack.c.l.b16 %v299
        %v387 = vunpack.c.l.b16 %v300
        %v388 = vunpack.c.l.b16 %v301
        %v389 = vunpack.c.l.b16 %v302
        %v390 = vunpack.c.l.b16 %v303
        %v391 = vunpack.c.l.b16 %v304
        %v392 = vunpack.c.l.b16 %v305
        %v393 = vunpack.c.l.b16 %v306
        %v394 = vpack.c.b16 %v363, %v362
        %v395 = vpack.c.b16 %v365, %v364
        %v396 = vpack.c.b16 %v367, %v366
        %v397 = vpack.c.b16 %v369, %v368
        %v398 = vpack.c.b16 %v371, %v370
        %v399 = vpack.c.b16 %v373, %v372
        %v400 = vpack.c.b16 %v375, %v374
        %v401 = vpack.c.b16 %v377, %v376
        %v402 = vpack.c.b16 %v379, %v378
        %v403 = vpack.c.b16 %v381, %v380
        %v404 = vpack.c.b16 %v383, %v382
        %v405 = vpack.c.b16 %v385, %v384
        %v406 = vpack.c.b16 %v387, %v386
        %v407 = vpack.c.b16 %v389, %v388
        %v408 = vpack.c.b16 %v391, %v390
        %v409 = vpack.c.b16 %v393, %v392
        %v442 = vunpack.c.l.b16 %v307
        %v443 = vunpack.c.l.b16 %v308
        %v444 = vunpack.c.l.b16 %v309
        %v445 = vunpack.c.l.b16 %v310
        %v446 = vunpack.c.l.b16 %v311
        %v447 = vunpack.c.l.b16 %v312
        %v448 = vunpack.c.l.b16 %v313
        %v449 = vunpack.c.l.b16 %v314
        %v450 = vunpack.c.l.b16 %v315
        %v451 = vunpack.c.l.b16 %v316
        %v452 = vunpack.c.l.b16 %v317
        %v453 = vunpack.c.l.b16 %v318
        %v454 = vunpack.c.l.b16 %v319
        %v455 = vunpack.c.l.b16 %v320
        %v456 = vunpack.c.l.b16 %v321
        %v457 = vunpack.c.l.b16 %v322
        %v458 = vpack.c.b16 %v443, %v442
        %v459 = vpack.c.b16 %v445, %v444
        %v460 = vpack.c.b16 %v447, %v446
        %v461 = vpack.c.b16 %v449, %v448
        %v462 = vpack.c.b16 %v451, %v450
        %v463 = vpack.c.b16 %v453, %v452
        %v464 = vpack.c.b16 %v455, %v454
        %v465 = vpack.c.b16 %v457, %v456
        %474 = vmatprep.subr.bf16.mxu0 0
        %475 = vmatpush1.bf16.msra.mxu0 %v458
        %476 = vmatprep.subr.bf16.mxu0 0
        %477 = vmatpush1.bf16.msra.mxu0 %v459
        %478 = vmatprep.subr.bf16.mxu0 0
        %479 = vmatpush1.bf16.msra.mxu0 %v460
        %480 = vmatprep.subr.bf16.mxu0 0
        %481 = vmatpush1.bf16.msra.mxu0 %v461
        %482 = vmatprep.subr.bf16.mxu0 0
        %483 = vmatpush1.bf16.msra.mxu0 %v462
        %484 = vmatprep.subr.bf16.mxu0 0
        %485 = vmatpush1.bf16.msra.mxu0 %v463
        %486 = vmatprep.subr.bf16.mxu0 0
        %487 = vmatpush1.bf16.msra.mxu0 %v464
        %488 = vmatprep.subr.bf16.mxu0 0
        %489 = vmatpush1.bf16.msra.mxu0 %v465
        %490 = vmatprep.subr.bf16.mxu0 0
        %491 = vmatpush1.bf16.msra.mxu0 0
        %492 = vmatprep.subr.bf16.mxu0 0
        %493 = vmatpush1.bf16.msra.mxu0 0
        %494 = vmatprep.subr.bf16.mxu0 0
        %495 = vmatpush1.bf16.msra.mxu0 0
        %496 = vmatprep.subr.bf16.mxu0 0
        %497 = vmatpush1.bf16.msra.mxu0 0
        %498 = vmatprep.subr.bf16.mxu0 0
        %499 = vmatpush1.bf16.msra.mxu0 0
        %500 = vmatprep.subr.bf16.mxu0 0
        %501 = vmatpush1.bf16.msra.mxu0 0
        %502 = vmatprep.subr.bf16.mxu0 0
        %503 = vmatpush1.bf16.msra.mxu0 0
        %504 = vmatprep.subr.bf16.mxu0 0
        %505 = vmatpush1.bf16.msra.mxu0 0
        %506 = vmatprep.mubr.bf16.mxu0 0
        %507 = vmatmul.mubr.bf16.gmra.mrb[0].mxu0 %v394
        %v508 = vpop.f32.mrb[0].mxu0
        %v509 = vadd.f32 %v328, %v508
        %v510 = vpop.f32.mrb[0].mxu0
        %v511 = vpop.f32.mrb[0].mxu0
        %v512 = vadd.f32 %v328, %v511
        %v513 = vpop.f32.mrb[0].mxu0
        %514 = vmatprep.mubr.bf16.mxu0 0
        %515 = vmatmul.mubr.bf16.gmra.mrb[0].mxu0 %v395
        %v516 = vpop.f32.mrb[0].mxu0
        %v517 = vadd.f32 %v328, %v516
        %v518 = vpop.f32.mrb[0].mxu0
        %v519 = vpop.f32.mrb[0].mxu0
        %v520 = vadd.f32 %v328, %v519
        %v521 = vpop.f32.mrb[0].mxu0
        %522 = vmatprep.mubr.bf16.mxu0 0
        %523 = vmatmul.mubr.bf16.gmra.mrb[0].mxu0 %v396
        %v524 = vpop.f32.mrb[0].mxu0
        %v525 = vadd.f32 %v328, %v524
        %v526 = vpop.f32.mrb[0].mxu0
        %v527 = vpop.f32.mrb[0].mxu0
        %v528 = vadd.f32 %v328, %v527
        %v529 = vpop.f32.mrb[0].mxu0
        %530 = vmatprep.mubr.bf16.mxu0 0
        %531 = vmatmul.mubr.bf16.gmra.mrb[0].mxu0 %v397
        %v532 = vpop.f32.mrb[0].mxu0
        %v533 = vadd.f32 %v328, %v532
        %v534 = vpop.f32.mrb[0].mxu0
        %v535 = vpop.f32.mrb[0].mxu0
        %v536 = vadd.f32 %v328, %v535
        %v537 = vpop.f32.mrb[0].mxu0
        %538 = vmatprep.mubr.bf16.mxu0 0
        %539 = vmatmul.mubr.bf16.gmra.mrb[0].mxu0 %v398
        %v540 = vpop.f32.mrb[0].mxu0
        %v541 = vadd.f32 %v328, %v540
        %v542 = vpop.f32.mrb[0].mxu0
        %v543 = vpop.f32.mrb[0].mxu0
        %v544 = vadd.f32 %v328, %v543
        %v545 = vpop.f32.mrb[0].mxu0
        %546 = vmatprep.mubr.bf16.mxu0 0
        %547 = vmatmul.mubr.bf16.gmra.mrb[0].mxu0 %v399
        %v548 = vpop.f32.mrb[0].mxu0
        %v549 = vadd.f32 %v328, %v548
        %v550 = vpop.f32.mrb[0].mxu0
        %v551 = vpop.f32.mrb[0].mxu0
        %v552 = vadd.f32 %v328, %v551
        %v553 = vpop.f32.mrb[0].mxu0
        %554 = vmatprep.mubr.bf16.mxu0 0
        %555 = vmatmul.mubr.bf16.gmra.mrb[0].mxu0 %v400
        %v556 = vpop.f32.mrb[0].mxu0
        %v557 = vadd.f32 %v328, %v556
        %v558 = vpop.f32.mrb[0].mxu0
        %v559 = vpop.f32.mrb[0].mxu0
        %v560 = vadd.f32 %v328, %v559
        %v561 = vpop.f32.mrb[0].mxu0
        %562 = vmatprep.mubr.bf16.mxu0 0
        %563 = vmatmul.mubr.bf16.gmra.mrb[0].mxu0 %v401
        %v564 = vpop.f32.mrb[0].mxu0
        %v565 = vadd.f32 %v328, %v564
        %v566 = vpop.f32.mrb[0].mxu0
        %v567 = vpop.f32.mrb[0].mxu0
        %v568 = vadd.f32 %v328, %v567
        %v569 = vpop.f32.mrb[0].mxu0
        %570 = vmatprep.mubr.bf16.mxu0 0
        %571 = vmatmul.mubr.bf16.gmra.mrb[0].mxu0 %v402
        %v572 = vpop.f32.mrb[0].mxu0
        %v573 = vadd.f32 %v328, %v572
        %v574 = vpop.f32.mrb[0].mxu0
        %v575 = vpop.f32.mrb[0].mxu0
        %v576 = vadd.f32 %v328, %v575
        %v577 = vpop.f32.mrb[0].mxu0
        %578 = vmatprep.mubr.bf16.mxu0 0
        %579 = vmatmul.mubr.bf16.gmra.mrb[0].mxu0 %v403
        %v580 = vpop.f32.mrb[0].mxu0
        %v581 = vadd.f32 %v328, %v580
        %v582 = vpop.f32.mrb[0].mxu0
        %v583 = vpop.f32.mrb[0].mxu0
        %v584 = vadd.f32 %v328, %v583
        %v585 = vpop.f32.mrb[0].mxu0
        %586 = vmatprep.mubr.bf16.mxu0 0
        %587 = vmatmul.mubr.bf16.gmra.mrb[0].mxu0 %v404
        %v588 = vpop.f32.mrb[0].mxu0
        %v589 = vadd.f32 %v328, %v588
        %v590 = vpop.f32.mrb[0].mxu0
        %v591 = vpop.f32.mrb[0].mxu0
        %v592 = vadd.f32 %v328, %v591
        %v593 = vpop.f32.mrb[0].mxu0
        %594 = vmatprep.mubr.bf16.mxu0 0
        %595 = vmatmul.mubr.bf16.gmra.mrb[0].mxu0 %v405
        %v596 = vpop.f32.mrb[0].mxu0
        %v597 = vadd.f32 %v328, %v596
        %v598 = vpop.f32.mrb[0].mxu0
        %v599 = vpop.f32.mrb[0].mxu0
        %v600 = vadd.f32 %v328, %v599
        %v601 = vpop.f32.mrb[0].mxu0
        %602 = vmatprep.mubr.bf16.mxu0 0
        %603 = vmatmul.mubr.bf16.gmra.mrb[0].mxu0 %v406
        %v604 = vpop.f32.mrb[0].mxu0
        %v605 = vadd.f32 %v328, %v604
        %v606 = vpop.f32.mrb[0].mxu0
        %v607 = vpop.f32.mrb[0].mxu0
        %v608 = vadd.f32 %v328, %v607
        %v609 = vpop.f32.mrb[0].mxu0
        %610 = vmatprep.mubr.bf16.mxu0 0
        %611 = vmatmul.mubr.bf16.gmra.mrb[0].mxu0 %v407
        %v612 = vpop.f32.mrb[0].mxu0
        %v613 = vadd.f32 %v328, %v612
        %v614 = vpop.f32.mrb[0].mxu0
        %v615 = vpop.f32.mrb[0].mxu0
        %v616 = vadd.f32 %v328, %v615
        %v617 = vpop.f32.mrb[0].mxu0
        %618 = vmatprep.mubr.bf16.mxu0 0
        %619 = vmatmul.mubr.bf16.gmra.mrb[0].mxu0 %v408
        %v620 = vpop.f32.mrb[0].mxu0
        %v621 = vadd.f32 %v328, %v620
        %v622 = vpop.f32.mrb[0].mxu0
        %v623 = vpop.f32.mrb[0].mxu0
        %v624 = vadd.f32 %v328, %v623
        %v625 = vpop.f32.mrb[0].mxu0
        %626 = vmatprep.mubr.bf16.mxu0 0
        %627 = vmatmul.mubr.bf16.gmra.mrb[0].mxu0 %v409
        %v628 = vpop.f32.mrb[0].mxu0
        %v629 = vadd.f32 %v328, %v628
        %v630 = vpop.f32.mrb[0].mxu0
        %v631 = vpop.f32.mrb[0].mxu0
        %v632 = vadd.f32 %v328, %v631
        %v633 = vpop.f32.mrb[0].mxu0
        %634 = vdwg.mxu0
        %v635 = vmax.f32 %v509, 0.0
        %v636 = vmax.f32 %v512, 0.0
        %v637 = vmax.f32 %v517, 0.0
        %v638 = vmax.f32 %v520, 0.0
        %v639 = vmax.f32 %v525, 0.0
        %v640 = vmax.f32 %v528, 0.0
        %v641 = vmax.f32 %v533, 0.0
        %v642 = vmax.f32 %v536, 0.0
        %v643 = vmax.f32 %v541, 0.0
        %v644 = vmax.f32 %v544, 0.0
        %v645 = vmax.f32 %v549, 0.0
        %v646 = vmax.f32 %v552, 0.0
        %v647 = vmax.f32 %v557, 0.0
        %v648 = vmax.f32 %v560, 0.0
        %v649 = vmax.f32 %v565, 0.0
        %v650 = vmax.f32 %v568, 0.0
        %v651 = vmax.f32 %v573, 0.0
        %v652 = vmax.f32 %v576, 0.0
        %v653 = vmax.f32 %v581, 0.0
        %v654 = vmax.f32 %v584, 0.0
        %v655 = vmax.f32 %v589, 0.0
        %v656 = vmax.f32 %v592, 0.0
        %v657 = vmax.f32 %v597, 0.0
        %v658 = vmax.f32 %v600, 0.0
        %v659 = vmax.f32 %v605, 0.0
        %v660 = vmax.f32 %v608, 0.0
        %v661 = vmax.f32 %v613, 0.0
        %v662 = vmax.f32 %v616, 0.0
        %v663 = vmax.f32 %v621, 0.0
        %v664 = vmax.f32 %v624, 0.0
        %v665 = vmax.f32 %v629, 0.0
        %v666 = vmax.f32 %v632, 0.0
        %v667 = vpack.c.bf16 %v636, %v635
        %v668 = vpack.c.bf16 %v638, %v637
        %v669 = vpack.c.bf16 %v640, %v639
        %v670 = vpack.c.bf16 %v642, %v641
        %v671 = vpack.c.bf16 %v644, %v643
        %v672 = vpack.c.bf16 %v646, %v645
        %v673 = vpack.c.bf16 %v648, %v647
        %v674 = vpack.c.bf16 %v650, %v649
        %v675 = vpack.c.bf16 %v652, %v651
        %v676 = vpack.c.bf16 %v654, %v653
        %v677 = vpack.c.bf16 %v656, %v655
        %v678 = vpack.c.bf16 %v658, %v657
        %v679 = vpack.c.bf16 %v660, %v659
        %v680 = vpack.c.bf16 %v662, %v661
        %v681 = vpack.c.bf16 %v664, %v663
        %v682 = vpack.c.bf16 %v666, %v665
        %v683 = vld [vmem:[#allocation7] sm:$0xf]
        %v684 = vld [vmem:[#allocation7 + $0x4] sm:$0xf]
        %v685 = vld [vmem:[#allocation7 + $0x8] sm:$0xf]
        %v686 = vld [vmem:[#allocation7 + $0xc] sm:$0xf]
        %v687 = vld [vmem:[#allocation7 + $0x10] sm:$0xf]
        %v688 = vld [vmem:[#allocation7 + $0x14] sm:$0xf]
        %v689 = vld [vmem:[#allocation7 + $0x18] sm:$0xf]
        %v690 = vld [vmem:[#allocation7 + $0x1c] sm:$0xf]
        %v691 = vld [vmem:[#allocation7 + $0x20] sm:$0xf]
        %v692 = vld [vmem:[#allocation7 + $0x24] sm:$0xf]
        %v693 = vld [vmem:[#allocation7 + $0x28] sm:$0xf]
        %v694 = vld [vmem:[#allocation7 + $0x2c] sm:$0xf]
        %v695 = vld [vmem:[#allocation7 + $0x30] sm:$0xf]
        %v696 = vld [vmem:[#allocation7 + $0x34] sm:$0xf]
        %v697 = vld [vmem:[#allocation7 + $0x38] sm:$0xf]
        %v698 = vld [vmem:[#allocation7 + $0x3c] sm:$0xf]
        %v699 = vld [vmem:[%s4] sm:$0x1]
        %v701 = vlaneseq
        %v702 = vshrl.u32 %v701, 7
        %v703 = vsub.s32 0, %v702
        %v704 = vrot.slane %v699, %v703
        %v722 = vunpack.c.l.b16 %v683
        %v723 = vunpack.c.l.b16 %v684
        %v724 = vunpack.c.l.b16 %v685
        %v725 = vunpack.c.l.b16 %v686
        %v726 = vunpack.c.l.b16 %v687
        %v727 = vunpack.c.l.b16 %v688
        %v728 = vunpack.c.l.b16 %v689
        %v729 = vunpack.c.l.b16 %v690
        %v730 = vunpack.c.l.b16 %v691
        %v731 = vunpack.c.l.b16 %v692
        %v732 = vunpack.c.l.b16 %v693
        %v733 = vunpack.c.l.b16 %v694
        %v734 = vunpack.c.l.b16 %v695
        %v735 = vunpack.c.l.b16 %v696
        %v736 = vunpack.c.l.b16 %v697
        %v737 = vunpack.c.l.b16 %v698
        %v738 = vpack.c.b16 %v723, %v722
        %v739 = vpack.c.b16 %v725, %v724
        %v740 = vpack.c.b16 %v727, %v726
        %v741 = vpack.c.b16 %v729, %v728
        %v742 = vpack.c.b16 %v731, %v730
        %v743 = vpack.c.b16 %v733, %v732
        %v744 = vpack.c.b16 %v735, %v734
        %v745 = vpack.c.b16 %v737, %v736
        %754 = vmatprep.subr.bf16.mxu0 0
        %755 = vmatpush1.bf16.msra.mxu0 %v738
        %756 = vmatprep.subr.bf16.mxu0 0
        %757 = vmatpush1.bf16.msra.mxu0 %v739
        %758 = vmatprep.subr.bf16.mxu0 0
        %759 = vmatpush1.bf16.msra.mxu0 %v740
        %760 = vmatprep.subr.bf16.mxu0 0
        %761 = vmatpush1.bf16.msra.mxu0 %v741
        %762 = vmatprep.subr.bf16.mxu0 0
        %763 = vmatpush1.bf16.msra.mxu0 %v742
        %764 = vmatprep.subr.bf16.mxu0 0
        %765 = vmatpush1.bf16.msra.mxu0 %v743
        %766 = vmatprep.subr.bf16.mxu0 0
        %767 = vmatpush1.bf16.msra.mxu0 %v744
        %768 = vmatprep.subr.bf16.mxu0 0
        %769 = vmatpush1.bf16.msra.mxu0 %v745
        %770 = vmatprep.subr.bf16.mxu0 0
        %771 = vmatpush1.bf16.msra.mxu0 0
        %772 = vmatprep.subr.bf16.mxu0 0
        %773 = vmatpush1.bf16.msra.mxu0 0
        %774 = vmatprep.subr.bf16.mxu0 0
        %775 = vmatpush1.bf16.msra.mxu0 0
        %776 = vmatprep.subr.bf16.mxu0 0
        %777 = vmatpush1.bf16.msra.mxu0 0
        %778 = vmatprep.subr.bf16.mxu0 0
        %779 = vmatpush1.bf16.msra.mxu0 0
        %780 = vmatprep.subr.bf16.mxu0 0
        %781 = vmatpush1.bf16.msra.mxu0 0
        %782 = vmatprep.subr.bf16.mxu0 0
        %783 = vmatpush1.bf16.msra.mxu0 0
        %784 = vmatprep.subr.bf16.mxu0 0
        %785 = vmatpush1.bf16.msra.mxu0 0
        %786 = vmatprep.mubr.bf16.mxu0 0
        %787 = vmatmul.mubr.bf16.gmra.mrb[0].mxu0 %v667
        %v788 = vpop.f32.mrb[0].mxu0
        %v789 = vadd.f32 %v704, %v788
        %v790 = vpop.f32.mrb[0].mxu0
        %v791 = vpop.f32.mrb[0].mxu0
        %v792 = vadd.f32 %v704, %v791
        %v793 = vpop.f32.mrb[0].mxu0
        %794 = vmatprep.mubr.bf16.mxu0 0
        %795 = vmatmul.mubr.bf16.gmra.mrb[0].mxu0 %v668
        %v796 = vpop.f32.mrb[0].mxu0
        %v797 = vadd.f32 %v704, %v796
        %v798 = vpop.f32.mrb[0].mxu0
        %v799 = vpop.f32.mrb[0].mxu0
        %v800 = vadd.f32 %v704, %v799
        %v801 = vpop.f32.mrb[0].mxu0
        %802 = vmatprep.mubr.bf16.mxu0 0
        %803 = vmatmul.mubr.bf16.gmra.mrb[0].mxu0 %v669
        %v804 = vpop.f32.mrb[0].mxu0
        %v805 = vadd.f32 %v704, %v804
        %v806 = vpop.f32.mrb[0].mxu0
        %v807 = vpop.f32.mrb[0].mxu0
        %v808 = vadd.f32 %v704, %v807
        %v809 = vpop.f32.mrb[0].mxu0
        %810 = vmatprep.mubr.bf16.mxu0 0
        %811 = vmatmul.mubr.bf16.gmra.mrb[0].mxu0 %v670
        %v812 = vpop.f32.mrb[0].mxu0
        %v813 = vadd.f32 %v704, %v812
        %v814 = vpop.f32.mrb[0].mxu0
        %v815 = vpop.f32.mrb[0].mxu0
        %v816 = vadd.f32 %v704, %v815
        %v817 = vpop.f32.mrb[0].mxu0
        %818 = vmatprep.mubr.bf16.mxu0 0
        %819 = vmatmul.mubr.bf16.gmra.mrb[0].mxu0 %v671
        %v820 = vpop.f32.mrb[0].mxu0
        %v821 = vadd.f32 %v704, %v820
        %v822 = vpop.f32.mrb[0].mxu0
        %v823 = vpop.f32.mrb[0].mxu0
        %v824 = vadd.f32 %v704, %v823
        %v825 = vpop.f32.mrb[0].mxu0
        %826 = vmatprep.mubr.bf16.mxu0 0
        %827 = vmatmul.mubr.bf16.gmra.mrb[0].mxu0 %v672
        %v828 = vpop.f32.mrb[0].mxu0
        %v829 = vadd.f32 %v704, %v828
        %v830 = vpop.f32.mrb[0].mxu0
        %v831 = vpop.f32.mrb[0].mxu0
        %v832 = vadd.f32 %v704, %v831
        %v833 = vpop.f32.mrb[0].mxu0
        %834 = vmatprep.mubr.bf16.mxu0 0
        %835 = vmatmul.mubr.bf16.gmra.mrb[0].mxu0 %v673
        %v836 = vpop.f32.mrb[0].mxu0
        %v837 = vadd.f32 %v704, %v836
        %v838 = vpop.f32.mrb[0].mxu0
        %v839 = vpop.f32.mrb[0].mxu0
        %v840 = vadd.f32 %v704, %v839
        %v841 = vpop.f32.mrb[0].mxu0
        %842 = vmatprep.mubr.bf16.mxu0 0
        %843 = vmatmul.mubr.bf16.gmra.mrb[0].mxu0 %v674
        %v844 = vpop.f32.mrb[0].mxu0
        %v845 = vadd.f32 %v704, %v844
        %v846 = vpop.f32.mrb[0].mxu0
        %v847 = vpop.f32.mrb[0].mxu0
        %v848 = vadd.f32 %v704, %v847
        %v849 = vpop.f32.mrb[0].mxu0
        %850 = vmatprep.mubr.bf16.mxu0 0
        %851 = vmatmul.mubr.bf16.gmra.mrb[0].mxu0 %v675
        %v852 = vpop.f32.mrb[0].mxu0
        %v853 = vadd.f32 %v704, %v852
        %v854 = vpop.f32.mrb[0].mxu0
        %v855 = vpop.f32.mrb[0].mxu0
        %v856 = vadd.f32 %v704, %v855
        %v857 = vpop.f32.mrb[0].mxu0
        %858 = vmatprep.mubr.bf16.mxu0 0
        %859 = vmatmul.mubr.bf16.gmra.mrb[0].mxu0 %v676
        %v860 = vpop.f32.mrb[0].mxu0
        %v861 = vadd.f32 %v704, %v860
        %v862 = vpop.f32.mrb[0].mxu0
        %v863 = vpop.f32.mrb[0].mxu0
        %v864 = vadd.f32 %v704, %v863
        %v865 = vpop.f32.mrb[0].mxu0
        %866 = vmatprep.mubr.bf16.mxu0 0
        %867 = vmatmul.mubr.bf16.gmra.mrb[0].mxu0 %v677
        %v868 = vpop.f32.mrb[0].mxu0
        %v869 = vadd.f32 %v704, %v868
        %v870 = vpop.f32.mrb[0].mxu0
        %v871 = vpop.f32.mrb[0].mxu0
        %v872 = vadd.f32 %v704, %v871
        %v873 = vpop.f32.mrb[0].mxu0
        %874 = vmatprep.mubr.bf16.mxu0 0
        %875 = vmatmul.mubr.bf16.gmra.mrb[0].mxu0 %v678
        %v876 = vpop.f32.mrb[0].mxu0
        %v877 = vadd.f32 %v704, %v876
        %v878 = vpop.f32.mrb[0].mxu0
        %v879 = vpop.f32.mrb[0].mxu0
        %v880 = vadd.f32 %v704, %v879
        %v881 = vpop.f32.mrb[0].mxu0
        %882 = vmatprep.mubr.bf16.mxu0 0
        %883 = vmatmul.mubr.bf16.gmra.mrb[0].mxu0 %v679
        %v884 = vpop.f32.mrb[0].mxu0
        %v885 = vadd.f32 %v704, %v884
        %v886 = vpop.f32.mrb[0].mxu0
        %v887 = vpop.f32.mrb[0].mxu0
        %v888 = vadd.f32 %v704, %v887
        %v889 = vpop.f32.mrb[0].mxu0
        %890 = vmatprep.mubr.bf16.mxu0 0
        %891 = vmatmul.mubr.bf16.gmra.mrb[0].mxu0 %v680
        %v892 = vpop.f32.mrb[0].mxu0
        %v893 = vadd.f32 %v704, %v892
        %v894 = vpop.f32.mrb[0].mxu0
        %v895 = vpop.f32.mrb[0].mxu0
        %v896 = vadd.f32 %v704, %v895
        %v897 = vpop.f32.mrb[0].mxu0
        %898 = vmatprep.mubr.bf16.mxu0 0
        %899 = vmatmul.mubr.bf16.gmra.mrb[0].mxu0 %v681
        %v900 = vpop.f32.mrb[0].mxu0
        %v901 = vadd.f32 %v704, %v900
        %v902 = vpop.f32.mrb[0].mxu0
        %v903 = vpop.f32.mrb[0].mxu0
        %v904 = vadd.f32 %v704, %v903
        %v905 = vpop.f32.mrb[0].mxu0
        %906 = vmatprep.mubr.bf16.mxu0 0
        %907 = vmatmul.mubr.bf16.gmra.mrb[0].mxu0 %v682
        %v908 = vpop.f32.mrb[0].mxu0
        %v909 = vadd.f32 %v704, %v908
        %v910 = vpop.f32.mrb[0].mxu0
        %v911 = vpop.f32.mrb[0].mxu0
        %v912 = vadd.f32 %v704, %v911
        %v913 = vpop.f32.mrb[0].mxu0
        %914 = vdwg.mxu0
        %915 = vst [vmem:[%s271] sm:$0xff] %v789
        %916 = vst [vmem:[%s271 + $0x8] sm:$0xff] %v792
        %917 = vst [vmem:[%s271 + $0x10] sm:$0xff] %v797
        %918 = vst [vmem:[%s271 + $0x18] sm:$0xff] %v800
        %919 = vst [vmem:[%s271 + $0x20] sm:$0xff] %v805
        %920 = vst [vmem:[%s271 + $0x28] sm:$0xff] %v808
        %921 = vst [vmem:[%s271 + $0x30] sm:$0xff] %v813
        %922 = vst [vmem:[%s271 + $0x38] sm:$0xff] %v816
        %923 = vst [vmem:[%s271 + $0x40] sm:$0xff] %v821
        %924 = vst [vmem:[%s271 + $0x48] sm:$0xff] %v824
        %925 = vst [vmem:[%s271 + $0x50] sm:$0xff] %v829
        %926 = vst [vmem:[%s271 + $0x58] sm:$0xff] %v832
        %927 = vst [vmem:[%s271 + $0x60] sm:$0xff] %v837
        %928 = vst [vmem:[%s271 + $0x68] sm:$0xff] %v840
        %929 = vst [vmem:[%s271 + $0x70] sm:$0xff] %v845
        %930 = vst [vmem:[%s271 + $0x78] sm:$0xff] %v848
        %931 = vst [vmem:[%s271 + $0x80] sm:$0xff] %v853
        %932 = vst [vmem:[%s271 + $0x88] sm:$0xff] %v856
        %933 = vst [vmem:[%s271 + $0x90] sm:$0xff] %v861
        %934 = vst [vmem:[%s271 + $0x98] sm:$0xff] %v864
        %935 = vst [vmem:[%s271 + $0xa0] sm:$0xff] %v869
        %936 = vst [vmem:[%s271 + $0xa8] sm:$0xff] %v872
        %937 = vst [vmem:[%s271 + $0xb0] sm:$0xff] %v877
        %938 = vst [vmem:[%s271 + $0xb8] sm:$0xff] %v880
        %939 = vst [vmem:[%s271 + $0xc0] sm:$0xff] %v885
        %940 = vst [vmem:[%s271 + $0xc8] sm:$0xff] %v888
        %941 = vst [vmem:[%s271 + $0xd0] sm:$0xff] %v893
        %942 = vst [vmem:[%s271 + $0xd8] sm:$0xff] %v896
        %943 = vst [vmem:[%s271 + $0xe0] sm:$0xff] %v901
        %944 = vst [vmem:[%s271 + $0xe8] sm:$0xff] %v904
        %945 = vst [vmem:[%s271 + $0xf0] sm:$0xff] %v909
        %946 = vst [vmem:[%s271 + $0xf8] sm:$0xff] %v912
        %s947 = sand.u32 %s141, 1
        %s948 = scalar_lea.sflag [#allocation4], %s947
        %s949 = sand.u32 %s141, 1
        %s950 = smul.addr %s949, 256
        %s951 = scalar_lea.vmem [#allocation8], %s950
        // Predicated region
        $region53: #{tpu_custom_call.1} parent=39 // pred_check
          %p952 = pneg %p151
        $region54: #{tpu_custom_call.1} parent=39 // pred_check_branch
          %954 = sbr.rel (%p952) target = $region56
        $region55: #{tpu_custom_call.1} parent=39 // pred_region
          %s955 = smul.u32 32, %s23
          %s957 = ssub.s32 4096, 4096
          %958 = vsyncadd %s948, %s957
          %s959 = smul.addr %s955, 128
          %s960 = scalar_lea.hbm %s5, %s959
          %s961 = sshll.u32 %s951, 4
          %s962 = int_to_ptr.vmem [resolvable:$true] %s961
          %967 = dma.vmem_to_hbm [thread:$0]  %s962, 4096, %s960, %s948, 128, 128, 8
        $region56: #{tpu_custom_call.1} parent=39 // pred_fallthru
          _
      $region40: #{tpu_custom_call.1} parent=5 // pred_fallthru
        _
      %p968 = scmp.le.s32.totalorder 2, %s18
      // Predicated region
      $region57: #{tpu_custom_call.1} parent=5 // pred_check
        %p969 = pneg %p968
      $region58: #{tpu_custom_call.1} parent=5 // pred_check_branch
        %971 = sbr.rel (%p969) target = $region60
      $region59: #{tpu_custom_call.1} parent=5 // pred_region
        %s972 = ssub.s32 %s18, 2
        // Predicated region
        $region61: #{tpu_custom_call.1} parent=59 // pred_check
          %p973 = pneg %p157
        $region62: #{tpu_custom_call.1} parent=59 // pred_check_branch
          %975 = sbr.rel (%p973) target = $region64
        $region63: #{tpu_custom_call.1} parent=59 // pred_region
          %s976 = sand.u32 %s142, 1
          %s977 = scalar_lea.sflag [#allocation4], %s976
          %s978 = sand.u32 %s142, 1
          %s979 = smul.addr %s978, 256
          %s980 = scalar_lea.vmem [#allocation8], %s979
          %981 = dma.done %s977, 4096
        $region64: #{tpu_custom_call.1} parent=59 // pred_fallthru
          _
      $region60: #{tpu_custom_call.1} parent=5 // pred_fallthru
        _
    $region6: #{tpu_custom_call.1} parent=1 // loop_footer
      %s22 = sadd.s32 1, %s18
    $region7: #{tpu_custom_call.1} parent=1 // loop_footer_branch
      %17 = sbr.rel target = $region3
    $region8: #{tpu_custom_call.1} parent=1 // loop_exit
      _
    %982 = vsyncpa [#allocation3], 1
    %s983 = scalar_lea.sflag [#allocation3], 1
    %984 = vsyncpa %s983, 1
    %985 = vsyncpa [#allocation6], 1
    %986 = vsyncpa [#allocation4], 1
    %s987 = scalar_lea.sflag [#allocation4], 1
    %988 = vsyncpa %s987, 1

</llo_original>
